<compile_context>
chip_gen: v6e
topology: v6e:2x2x1
jax: 0.10.0
libtpu: 0.0.40
codegen_flags: <defaults>
</compile_context>

<pallas_src>
import functools

import jax
import jax.numpy as jnp
from jax.experimental import pallas as pl
from jax.experimental.pallas import tpu as pltpu

# module hyper-parameters (from dev/gpt_sampling.py)
BLOCK_SIZE = 8            # max sequence length
N_EMBD = 256
HEAD_SIZE = 64            # head_size used when instantiating Head (n_embd // n_heads)
ROPE_THETA = 10000.0


def head_kernel(x_ref, w_ref, cos_ref, sin_ref, mask_ref, o_ref):
    """One block of `block_b` batch elements (flattened to M = block_b*T rows)."""
    D = o_ref.shape[-1]

    # fused Q / Q_rot / K / K_rot / V projection: one wide MXU matmul,
    # bf16 inputs, f32 accumulation.  Q/K columns already carry D**-0.25.
    qkv = jnp.dot(x_ref[...], w_ref[...], preferred_element_type=jnp.float32)  # (M, 5D)

    cos = cos_ref[...]            # (M, D)   [cos | cos]      (rotate-half layout)
    sin = sin_ref[...]            # (M, D)   [-sin | +sin]    (sign folded in)

    # RoPE: out = q*cos + rotate_half(q)*sin.  rotate_half(x@W) == x@W_rot was
    # precomputed on the host (column permutation of W), so no in-kernel roll.
    q = qkv[:, 0 * D:1 * D] * cos + qkv[:, 1 * D:2 * D] * sin   # (M, D) f32
    k = qkv[:, 2 * D:3 * D] * cos + qkv[:, 3 * D:4 * D] * sin   # (M, D) f32
    v = qkv[:, 4 * D:5 * D]                                     # (M, D) f32

    # scores: q . k^T without an explicit transpose (contract last dims).
    # 1/sqrt(D) already folded into the weights -> scores are pre-scaled.
    s = jax.lax.dot_general(
        q.astype(jnp.bfloat16), k.astype(jnp.bfloat16),
        (((1,), (1,)), ((), ())),
        preferred_element_type=jnp.float32)                     # (M, M)

    # block-diagonal causal mask, additive (0 / -1e30): no inf arithmetic.
    s = s + mask_ref[...]
    s = s - jnp.max(s, axis=-1, keepdims=True)                  # XLU reduce (free slot)
    p = jnp.exp(s)                                              # EUP
    # reciprocal on the EUP slot instead of a vector divide.
    p = p * pl.reciprocal(jnp.sum(p, axis=-1, keepdims=True), approx=True)

    # attention-weight dropout: identity in eval mode.
    out = jnp.dot(p.astype(jnp.bfloat16), v.astype(jnp.bfloat16),
                  preferred_element_type=jnp.float32)           # (M, D)
    o_ref[...] = out.astype(o_ref.dtype)


def make_rope_tables(dim, seq_len, theta=ROPE_THETA):
    """Matches RotaryPositionEmbedding.__init__ (returns cos/sin of the angles)."""
    freqs = 1.0 / theta ** (jnp.arange(0, dim, 2)[: dim // 2].astype(jnp.float32) / dim)
    t = jnp.arange(seq_len, dtype=jnp.float32)
    ang = jnp.einsum('i,j->ij', t, freqs)      # (T, dim//2)
    return jnp.cos(ang), jnp.sin(ang)


@functools.partial(jax.jit, static_argnames=("block_b",))
def head_attention(x, wq, wk, wv, *, block_b=None):
    """x: (B, T, C) f32; wq/wk/wv: (C, D) f32 (already transposed, y = x @ W).
    Returns (B, T, D) f32, matching Head.forward in eval mode."""
    B, T, C = x.shape
    D = wq.shape[1]

    if block_b is None:
        # Fold batch elements together to enlarge the matmul M dimension, but
        # keep >= 2 grid steps so both v7x TensorCores get work (v5e/v6e are
        # single-TC and just see two tiny steps; per-step cost is ~0.35us).
        block_b = max(1, B // 2)
    assert B % block_b == 0, "block_b must divide the batch size"
    grid_b = B // block_b
    M = block_b * T

    # ---- host-side packing (jitted, done once per call, outside the kernel) ----
    # rotate-half column permutations: even features first then odd ("eo"),
    # and the rotated copy odd-first ("oe").  q.kT is invariant under a shared
    # permutation of q and k features, so results match the interleaved
    # (view_as_complex) RoPE exactly.
    eo = jnp.concatenate([jnp.arange(0, D, 2), jnp.arange(1, D, 2)])
    oe = jnp.concatenate([jnp.arange(1, D, 2), jnp.arange(0, D, 2)])
    # Fold the 1/sqrt(D) attention scale into Q and K (D**-0.25 each) so the
    # kernel never multiplies the (M, M) score matrix by a scalar.
    qk_scale = jnp.float32(D) ** -0.25
    wq_s = wq * qk_scale
    wk_s = wk * qk_scale
    # fused (C, 5D) weight: [Wq, Wq_rot, Wk, Wk_rot, Wv]
    wqkv = jnp.concatenate([wq_s[:, eo], wq_s[:, oe],
                            wk_s[:, eo], wk_s[:, oe], wv], axis=1)

    cos2, sin2 = make_rope_tables(D, T)
    cosf = jnp.concatenate([cos2, cos2], axis=1)          # (T, D)
    sinf = jnp.concatenate([-sin2, sin2], axis=1)         # (T, D), sign folded in
    cosf = jnp.tile(cosf, (block_b, 1))                   # (M, D)
    sinf = jnp.tile(sinf, (block_b, 1))

    # block-diagonal additive causal mask for the fused (M, M) score matrix
    r = jnp.arange(M)
    same_b = (r[:, None] // T) == (r[None, :] // T)
    causal = (r[:, None] % T) >= (r[None, :] % T)
    mask = jnp.where(same_b & causal, 0.0, -1e30).astype(jnp.float32)

    # bf16 matmul inputs (f32 accumulation inside the kernel)
    x2d = x.reshape(B * T, C).astype(jnp.bfloat16)
    wqkv = wqkv.astype(jnp.bfloat16)

    # Constant-index inputs (weights / tables / mask) keep the same block index
    # on every grid step, so Pallas DMAs them only once.
    out2d = pl.pallas_call(
        head_kernel,
        out_shape=jax.ShapeDtypeStruct((B * T, D), jnp.float32),
        grid_spec=pltpu.PrefetchScalarGridSpec(
            num_scalar_prefetch=0,
            grid=(grid_b,),
            in_specs=[
                pl.BlockSpec((M, C), lambda i: (i, 0)),        # x rows of this block
                pl.BlockSpec((C, 5 * D), lambda i: (0, 0)),    # fused packed weights
                pl.BlockSpec((M, D), lambda i: (0, 0)),        # cos table
                pl.BlockSpec((M, D), lambda i: (0, 0)),        # signed sin table
                pl.BlockSpec((M, M), lambda i: (0, 0)),        # additive causal mask
            ],
            out_specs=pl.BlockSpec((M, D), lambda i: (i, 0)),
        ),
        compiler_params=pltpu.CompilerParams(
            dimension_semantics=("parallel",)),
    )(x2d, wqkv, cosf, sinf, mask)
    return out2d.reshape(B, T, D)


def reference(x, wq, wk, wv):
    """Pure-JAX f32 re-implementation of Head.forward (eval mode)."""
    B, T, C = x.shape
    D = wq.shape[1]
    cos2, sin2 = make_rope_tables(D, T)

    def rope(z):
        zr = z.reshape(B, T, D // 2, 2)
        ze, zo = zr[..., 0], zr[..., 1]
        oe = ze * cos2[:T] - zo * sin2[:T]
        oo = ze * sin2[:T] + zo * cos2[:T]
        return jnp.stack([oe, oo], axis=-1).reshape(B, T, D)

    q = rope(x @ wq)
    k = rope(x @ wk)
    v = x @ wv
    s = jnp.einsum('btd,bsd->bts', q, k) * (D ** -0.5)
    mask = jnp.tril(jnp.ones((T, T), dtype=bool))
    s = jnp.where(mask, s, -jnp.inf)
    p = jax.nn.softmax(s, axis=-1)
    return jnp.einsum('bts,bsd->btd', p, v)


if __name__ == "__main__":
    B, T, C, D = 4, BLOCK_SIZE, N_EMBD, HEAD_SIZE

    key = jax.random.PRNGKey(0)
    kx, kq, kk, kv = jax.random.split(key, 4)

    x = jax.random.normal(kx, (B, T, C), dtype=jnp.float32)
    # nn.Linear weights stored transposed so y = x @ W (W: (in, out))
    wq = 0.02 * jax.random.normal(kq, (C, D), dtype=jnp.float32)
    wk = 0.02 * jax.random.normal(kk, (C, D), dtype=jnp.float32)
    wv = 0.02 * jax.random.normal(kv, (C, D), dtype=jnp.float32)

    out = head_attention(x, wq, wk, wv)
    out = jax.block_until_ready(out)

    ref = reference(x, wq, wk, wv)
    assert out.shape == (B, T, D)
    # bf16 matmul inputs (f32 accumulate) -> slightly looser tolerance than pure f32
    assert jnp.allclose(out, ref, rtol=2e-2, atol=2e-2), "mismatch vs pure-JAX reference"

    print("KERNEL_OK")
</pallas_src>

<mosaic_0001>
module attributes {stable_mosaic.version = 11 : i64} {
  func.func @head_kernel(%arg0: i32, %arg1: memref<16x256xbf16, #tpu.memory_space<vmem>>, %arg2: memref<256x320xbf16, #tpu.memory_space<vmem>>, %arg3: memref<16x64xf32, #tpu.memory_space<vmem>>, %arg4: memref<16x64xf32, #tpu.memory_space<vmem>>, %arg5: memref<16x16xf32, #tpu.memory_space<vmem>>, %arg6: memref<16x64xf32, #tpu.memory_space<vmem>>) attributes {dimension_semantics = [#tpu.dimension_semantics<parallel>], iteration_bounds = array<i64: 2>, scalar_prefetch = 0 : i64, scratch_operands = 0 : i64, tpu.core_type = #tpu.core_type<tc>, window_params = [{transform_indices = @transform_0, window_bounds = array<i64: 16, 256>}, {pipeline_mode = #tpu.pipeline_mode<synchronous>, transform_indices = @transform_1, window_bounds = array<i64: 256, 320>}, {pipeline_mode = #tpu.pipeline_mode<synchronous>, transform_indices = @transform_2, window_bounds = array<i64: 16, 64>}, {pipeline_mode = #tpu.pipeline_mode<synchronous>, transform_indices = @transform_3, window_bounds = array<i64: 16, 64>}, {pipeline_mode = #tpu.pipeline_mode<synchronous>, transform_indices = @transform_4, window_bounds = array<i64: 16, 16>}, {transform_indices = @transform_5, window_bounds = array<i64: 16, 64>}]} {
    %c0 = arith.constant 0 : index
    %c0_0 = arith.constant 0 : index
    %0 = vector.load %arg1[%c0, %c0_0] : memref<16x256xbf16, #tpu.memory_space<vmem>>, vector<16x256xbf16>
    %c0_1 = arith.constant 0 : index
    %c0_2 = arith.constant 0 : index
    %1 = vector.load %arg2[%c0_1, %c0_2] : memref<256x320xbf16, #tpu.memory_space<vmem>>, vector<256x320xbf16>
    %cst = arith.constant dense<0.000000e+00> : vector<16x320xf32>
    %2 = tpu.matmul %0, %1, %cst {dimension_numbers = #tpu.dot_dimension_numbers<[1], [0], [0], [1], [0, 0, 1, 1], [], []>} : vector<16x256xbf16>, vector<256x320xbf16>, vector<16x320xf32> -> vector<16x320xf32>
    %c0_3 = arith.constant 0 : index
    %c0_4 = arith.constant 0 : index
    %3 = vector.load %arg3[%c0_3, %c0_4] : memref<16x64xf32, #tpu.memory_space<vmem>>, vector<16x64xf32>
    %c0_5 = arith.constant 0 : index
    %c0_6 = arith.constant 0 : index
    %4 = vector.load %arg4[%c0_5, %c0_6] : memref<16x64xf32, #tpu.memory_space<vmem>>, vector<16x64xf32>
    %5 = vector.extract_strided_slice %2 {offsets = [0, 0], sizes = [16, 64], strides = [1, 1]} : vector<16x320xf32> to vector<16x64xf32>
    %6 = arith.mulf %5, %3 : vector<16x64xf32>
    %7 = vector.extract_strided_slice %2 {offsets = [0, 64], sizes = [16, 64], strides = [1, 1]} : vector<16x320xf32> to vector<16x64xf32>
    %8 = arith.mulf %7, %4 : vector<16x64xf32>
    %9 = arith.addf %6, %8 : vector<16x64xf32>
    %10 = vector.extract_strided_slice %2 {offsets = [0, 128], sizes = [16, 64], strides = [1, 1]} : vector<16x320xf32> to vector<16x64xf32>
    %11 = arith.mulf %10, %3 : vector<16x64xf32>
    %12 = vector.extract_strided_slice %2 {offsets = [0, 192], sizes = [16, 64], strides = [1, 1]} : vector<16x320xf32> to vector<16x64xf32>
    %13 = arith.mulf %12, %4 : vector<16x64xf32>
    %14 = arith.addf %11, %13 : vector<16x64xf32>
    %15 = vector.extract_strided_slice %2 {offsets = [0, 256], sizes = [16, 64], strides = [1, 1]} : vector<16x320xf32> to vector<16x64xf32>
    %16 = arith.truncf %9 : vector<16x64xf32> to vector<16x64xbf16>
    %17 = arith.truncf %14 : vector<16x64xf32> to vector<16x64xbf16>
    %cst_7 = arith.constant dense<0.000000e+00> : vector<16x16xf32>
    %18 = tpu.matmul %16, %17, %cst_7 {dimension_numbers = #tpu.dot_dimension_numbers<[1], [1], [0], [0], [0, 0, 1, 0], [], []>} : vector<16x64xbf16>, vector<16x64xbf16>, vector<16x16xf32> -> vector<16x16xf32>
    %c0_8 = arith.constant 0 : index
    %c0_9 = arith.constant 0 : index
    %19 = vector.load %arg5[%c0_8, %c0_9] : memref<16x16xf32, #tpu.memory_space<vmem>>, vector<16x16xf32>
    %20 = arith.addf %18, %19 : vector<16x16xf32>
    %cst_10 = arith.constant dense<0xFF800000> : vector<16xf32>
    %21 = vector.multi_reduction <maximumf>, %20, %cst_10 [1] : vector<16x16xf32> to vector<16xf32>
    %22 = vector.shape_cast %21 : vector<16xf32> to vector<16x1xf32>
    %23 = vector.broadcast %22 : vector<16x1xf32> to vector<16x16xf32>
    %24 = arith.subf %20, %23 : vector<16x16xf32>
    %25 = math.exp %24 : vector<16x16xf32>
    %cst_11 = arith.constant dense<0.000000e+00> : vector<16xf32>
    %26 = vector.multi_reduction <add>, %25, %cst_11 [1] : vector<16x16xf32> to vector<16xf32>
    %27 = vector.shape_cast %26 : vector<16xf32> to vector<16x1xf32>
    %28 = tpu.reciprocal %27 {approx = true} : vector<16x1xf32> -> vector<16x1xf32>
    %29 = vector.broadcast %28 : vector<16x1xf32> to vector<16x16xf32>
    %30 = arith.mulf %25, %29 : vector<16x16xf32>
    %31 = arith.truncf %30 : vector<16x16xf32> to vector<16x16xbf16>
    %32 = arith.truncf %15 : vector<16x64xf32> to vector<16x64xbf16>
    %cst_12 = arith.constant dense<0.000000e+00> : vector<16x64xf32>
    %33 = tpu.matmul %31, %32, %cst_12 {dimension_numbers = #tpu.dot_dimension_numbers<[1], [0], [0], [1], [0, 0, 1, 1], [], []>} : vector<16x16xbf16>, vector<16x64xbf16>, vector<16x64xf32> -> vector<16x64xf32>
    %c0_13 = arith.constant 0 : index
    %c0_14 = arith.constant 0 : index
    %34 = vector.load %arg6[%c0_13, %c0_14] : memref<16x64xf32, #tpu.memory_space<vmem>>, vector<16x64xf32>
    tpu.vector_store %arg6[%c0_13, %c0_14], %33 {strides = array<i32>} : memref<16x64xf32, #tpu.memory_space<vmem>>, vector<16x64xf32>,
    return
  }
  func.func @transform_0(%arg0: i32) -> (i32, i32) {
    %c0_i32 = arith.constant 0 : i32
    %c0_i32_0 = arith.constant 0 : i32
    return %arg0, %c0_i32 : i32, i32
  }
  func.func @transform_1(%arg0: i32) -> (i32, i32) {
    %c0_i32 = arith.constant 0 : i32
    %c0_i32_0 = arith.constant 0 : i32
    %c0_i32_1 = arith.constant 0 : i32
    return %c0_i32, %c0_i32_0 : i32, i32
  }
  func.func @transform_2(%arg0: i32) -> (i32, i32) {
    %c0_i32 = arith.constant 0 : i32
    %c0_i32_0 = arith.constant 0 : i32
    %c0_i32_1 = arith.constant 0 : i32
    return %c0_i32, %c0_i32_0 : i32, i32
  }
  func.func @transform_3(%arg0: i32) -> (i32, i32) {
    %c0_i32 = arith.constant 0 : i32
    %c0_i32_0 = arith.constant 0 : i32
    %c0_i32_1 = arith.constant 0 : i32
    return %c0_i32, %c0_i32_0 : i32, i32
  }
  func.func @transform_4(%arg0: i32) -> (i32, i32) {
    %c0_i32 = arith.constant 0 : i32
    %c0_i32_0 = arith.constant 0 : i32
    %c0_i32_1 = arith.constant 0 : i32
    return %c0_i32, %c0_i32_0 : i32, i32
  }
  func.func @transform_5(%arg0: i32) -> (i32, i32) {
    %c0_i32 = arith.constant 0 : i32
    %c0_i32_0 = arith.constant 0 : i32
    return %arg0, %c0_i32 : i32, i32
  }
}

</mosaic_0001>

<llo_original>
// kernel: head_attention.1
$region0: #{head_attention.1}
  #allocation0 [shape = 'u32[]', space=smem, size = 0x4, offset = 0x4, fixed_abs, tag = 'smem constant byte address 0x4 - core index']
  #allocation1 [shape = 'u32[144,128]{1,0:T(1,128)}', space=vmem, size = 0x12000, scoped, tag = 'internal scratch']
  %s0 = inlined_call_operand.vmem [shape: bf16[32,256], index: 0, kind: input, shape index: {}]
  %s1 = inlined_call_operand.vmem [shape: bf16[256,320], index: 1, kind: input, shape index: {}]
  %s2 = inlined_call_operand.vmem [shape: f32[16,64], index: 2, kind: input, shape index: {}]
  %s3 = inlined_call_operand.vmem [shape: f32[16,64], index: 3, kind: input, shape index: {}]
  %s4 = inlined_call_operand.vmem [shape: f32[16,16], index: 4, kind: input, shape index: {}]
  %s5 = inlined_call_operand.hbm [shape: f32[32,64], index: 5, kind: output, shape index: {}]
  %s6 = sld [smem:[#allocation0]]
  $region53: #{head_attention.1} parent=0
    _
  %s8 = ssub.s32 1, %s6
  %s9 = scalar_select 0, %s8, %s6
  $region1: #{head_attention.1} parent=0
    #allocation2 [shape = 'u8[16384]{0}', space=vmem, size = 0x4000, scoped, tag = 'output window, operand 0']
    #allocation3 [shape = 's32[2]{0}', space=sflag, size = 0x8, scoped, tag = 'scoped memory for head_attention.1']
    %10 = vsyncpa [#allocation3], 0
    %s11 = scalar_lea.sflag [#allocation3], 1
    %12 = vsyncpa %s11, 0
    loop: start=0, step=1, limit=4
    $region2: #{head_attention.1} parent=1 // loop_pre_header
      _
    $region3: #{head_attention.1} parent=1 // loop_header
      %s14 = sphi 0, %s18
      %p15 = scmp.ge.s32.totalorder %s14, 4
      %s24 = sphi 0, %s26
      %s27 = sphi 0, %s24
      %s28 = sphi 0, %s27
      %s44 = sphi 0, %s28
      %s48 = sphi 0, %s48
      %s50 = sphi 0, %s48
      %s51 = sphi 0, %s50
      %s65 = sphi 0, %s51
      %s69 = sphi 0, %s69
      %s71 = sphi 0, %s69
      %s72 = sphi 0, %s71
      %s86 = sphi 0, %s72
      %s90 = sphi 0, %s90
      %s92 = sphi 0, %s90
      %s93 = sphi 0, %s92
      %s107 = sphi 0, %s93
      %s111 = sphi 0, %s111
      %s113 = sphi 0, %s111
      %s114 = sphi 0, %s113
      %s128 = sphi 0, %s114
      %s134 = sphi 0, %s136
      %s137 = sphi 0, %s134
      %s138 = sphi 0, %s137
      %s154 = sphi 0, %s138
    $region4: #{head_attention.1} parent=1 // loop_header_branch
      %17 = sbr.rel (%p15) target = $region8
    $region5: #{head_attention.1} parent=1 // loop_body
      %s19 = ssub.s32 %s14, 1
      %s20 = ssub.s32 %s14, 2
      %s21 = sadd.s32 %s14, 1
      %s22 = ssub.s32 %s14, %s21
      %p23 = scmp.eq.s32.totalorder %s22, 0
      %s25 = sadd.s32 %s24, 1
      %s26 = scalar_select %p23, %s24, %s25
      %p29 = pneg %p23
      %p30 = scmp.eq.s32.totalorder %s14, 1
      %p31 = por %p29, %p30
      %p32 = scmp.ne.s32.totalorder %s24, %s27
      %p33 = scmp.eq.s32.totalorder %s14, 0
      %p34 = por %p32, %p33
      %p35 = scmp.ne.s32.totalorder %s24, %s27
      %p36 = scmp.eq.s32.totalorder %s19, 1
      %p37 = por %p35, %p36
      %p38 = scmp.ne.s32.totalorder %s27, %s28
      %p39 = scmp.eq.s32.totalorder %s19, 0
      %p40 = por %p38, %p39
      %p41 = scmp.ne.s32.totalorder %s27, %s28
      %p42 = scmp.eq.s32.totalorder %s20, 1
      %p43 = por %p41, %p42
      %p45 = scmp.ne.s32.totalorder %s28, %s44
      %p46 = scmp.eq.s32.totalorder %s20, 0
      %p47 = por %p45, %p46
      %s49 = sadd.s32 %s48, 1
      %p52 = scmp.eq.s32.totalorder %s14, 1
      %p53 = scmp.ne.s32.totalorder %s48, %s50
      %p54 = scmp.eq.s32.totalorder %s14, 0
      %p55 = por %p53, %p54
      %p56 = scmp.ne.s32.totalorder %s48, %s50
      %p57 = scmp.eq.s32.totalorder %s19, 1
      %p58 = por %p56, %p57
      %p59 = scmp.ne.s32.totalorder %s50, %s51
      %p60 = scmp.eq.s32.totalorder %s19, 0
      %p61 = por %p59, %p60
      %p62 = scmp.ne.s32.totalorder %s50, %s51
      %p63 = scmp.eq.s32.totalorder %s20, 1
      %p64 = por %p62, %p63
      %p66 = scmp.ne.s32.totalorder %s51, %s65
      %p67 = scmp.eq.s32.totalorder %s20, 0
      %p68 = por %p66, %p67
      %s70 = sadd.s32 %s69, 1
      %p73 = scmp.eq.s32.totalorder %s14, 1
      %p74 = scmp.ne.s32.totalorder %s69, %s71
      %p75 = scmp.eq.s32.totalorder %s14, 0
      %p76 = por %p74, %p75
      %p77 = scmp.ne.s32.totalorder %s69, %s71
      %p78 = scmp.eq.s32.totalorder %s19, 1
      %p79 = por %p77, %p78
      %p80 = scmp.ne.s32.totalorder %s71, %s72
      %p81 = scmp.eq.s32.totalorder %s19, 0
      %p82 = por %p80, %p81
      %p83 = scmp.ne.s32.totalorder %s71, %s72
      %p84 = scmp.eq.s32.totalorder %s20, 1
      %p85 = por %p83, %p84
      %p87 = scmp.ne.s32.totalorder %s72, %s86
      %p88 = scmp.eq.s32.totalorder %s20, 0
      %p89 = por %p87, %p88
      %s91 = sadd.s32 %s90, 1
      %p94 = scmp.eq.s32.totalorder %s14, 1
      %p95 = scmp.ne.s32.totalorder %s90, %s92
      %p96 = scmp.eq.s32.totalorder %s14, 0
      %p97 = por %p95, %p96
      %p98 = scmp.ne.s32.totalorder %s90, %s92
      %p99 = scmp.eq.s32.totalorder %s19, 1
      %p100 = por %p98, %p99
      %p101 = scmp.ne.s32.totalorder %s92, %s93
      %p102 = scmp.eq.s32.totalorder %s19, 0
      %p103 = por %p101, %p102
      %p104 = scmp.ne.s32.totalorder %s92, %s93
      %p105 = scmp.eq.s32.totalorder %s20, 1
      %p106 = por %p104, %p105
      %p108 = scmp.ne.s32.totalorder %s93, %s107
      %p109 = scmp.eq.s32.totalorder %s20, 0
      %p110 = por %p108, %p109
      %s112 = sadd.s32 %s111, 1
      %p115 = scmp.eq.s32.totalorder %s14, 1
      %p116 = scmp.ne.s32.totalorder %s111, %s113
      %p117 = scmp.eq.s32.totalorder %s14, 0
      %p118 = por %p116, %p117
      %p119 = scmp.ne.s32.totalorder %s111, %s113
      %p120 = scmp.eq.s32.totalorder %s19, 1
      %p121 = por %p119, %p120
      %p122 = scmp.ne.s32.totalorder %s113, %s114
      %p123 = scmp.eq.s32.totalorder %s19, 0
      %p124 = por %p122, %p123
      %p125 = scmp.ne.s32.totalorder %s113, %s114
      %p126 = scmp.eq.s32.totalorder %s20, 1
      %p127 = por %p125, %p126
      %p129 = scmp.ne.s32.totalorder %s114, %s128
      %p130 = scmp.eq.s32.totalorder %s20, 0
      %p131 = por %p129, %p130
      %s132 = ssub.s32 %s14, %s21
      %p133 = scmp.eq.s32.totalorder %s132, 0
      %s135 = sadd.s32 %s134, 1
      %s136 = scalar_select %p133, %s134, %s135
      %p139 = pneg %p133
      %p140 = scmp.eq.s32.totalorder %s14, 1
      %p141 = por %p139, %p140
      %p142 = scmp.ne.s32.totalorder %s134, %s137
      %p143 = scmp.eq.s32.totalorder %s14, 0
      %p144 = por %p142, %p143
      %p145 = scmp.ne.s32.totalorder %s134, %s137
      %p146 = scmp.eq.s32.totalorder %s19, 1
      %p147 = por %p145, %p146
      %p148 = scmp.ne.s32.totalorder %s137, %s138
      %p149 = scmp.eq.s32.totalorder %s19, 0
      %p150 = por %p148, %p149
      %p151 = scmp.ne.s32.totalorder %s137, %s138
      %p152 = scmp.eq.s32.totalorder %s20, 1
      %p153 = por %p151, %p152
      %p155 = scmp.ne.s32.totalorder %s138, %s154
      %p156 = scmp.eq.s32.totalorder %s20, 0
      %p157 = por %p155, %p156
      %p158 = scmp.le.s32.totalorder 1, %s14
      %p159 = scmp.lt.s32.totalorder %s14, 3
      %p160 = pnand %p158, %p159
      %p161 = pneg %p160
      // Predicated region
      $region9: #{head_attention.1} parent=5 // pred_check
        _
      $region10: #{head_attention.1} parent=5 // pred_check_branch
        %163 = sbr.rel (%p160) target = $region12
      $region11: #{head_attention.1} parent=5 // pred_region
        %s164 = ssub.s32 %s14, 1
        // Predicated region
        $region13: #{head_attention.1} parent=11 // pred_check
          %p165 = pneg %p61
        $region14: #{head_attention.1} parent=11 // pred_check_branch
          %167 = sbr.rel (%p165) target = $region16
        $region15: #{head_attention.1} parent=11 // pred_region
          _
        $region16: #{head_attention.1} parent=11 // pred_fallthru
          _
        // Predicated region
        $region17: #{head_attention.1} parent=11 // pred_check
          %p168 = pneg %p82
        $region18: #{head_attention.1} parent=11 // pred_check_branch
          %170 = sbr.rel (%p168) target = $region20
        $region19: #{head_attention.1} parent=11 // pred_region
          _
        $region20: #{head_attention.1} parent=11 // pred_fallthru
          _
        // Predicated region
        $region21: #{head_attention.1} parent=11 // pred_check
          %p171 = pneg %p103
        $region22: #{head_attention.1} parent=11 // pred_check_branch
          %173 = sbr.rel (%p171) target = $region24
        $region23: #{head_attention.1} parent=11 // pred_region
          _
        $region24: #{head_attention.1} parent=11 // pred_fallthru
          _
        // Predicated region
        $region25: #{head_attention.1} parent=11 // pred_check
          %p174 = pneg %p124
        $region26: #{head_attention.1} parent=11 // pred_check_branch
          %176 = sbr.rel (%p174) target = $region28
        $region27: #{head_attention.1} parent=11 // pred_region
          _
        $region28: #{head_attention.1} parent=11 // pred_fallthru
          _
      $region12: #{head_attention.1} parent=5 // pred_fallthru
        _
      %p177 = scmp.lt.s32.totalorder %s14, 2
      // Predicated region
      $region29: #{head_attention.1} parent=5 // pred_check
        %p178 = pneg %p177
      $region30: #{head_attention.1} parent=5 // pred_check_branch
        %180 = sbr.rel (%p178) target = $region32
      $region31: #{head_attention.1} parent=5 // pred_region
        // Predicated region
        $region33: #{head_attention.1} parent=31 // pred_check
          %p181 = pneg %p34
        $region34: #{head_attention.1} parent=31 // pred_check_branch
          %183 = sbr.rel (%p181) target = $region36
        $region35: #{head_attention.1} parent=31 // pred_region
          %s184 = smul.u32 2, %s14
          %p185 = scmp.lt.s32.totalorder %s184, 3
          %s186 = scalar_select %p185, %s184, 3
          %s187 = smul.addr %s186, 2
          %s188 = smul.addr %s187, 4
          %s189 = scalar_lea.vmem %s0, %s188
          %s190 = smul.u32 2, %s14
        $region36: #{head_attention.1} parent=31 // pred_fallthru
          _
      $region32: #{head_attention.1} parent=5 // pred_fallthru
        _
      %p191 = scmp.le.s32.totalorder 1, %s14
      %p192 = scmp.lt.s32.totalorder %s14, 3
      %p193 = pnand %p191, %p192
      %p194 = pneg %p193
      // Predicated region
      $region37: #{head_attention.1} parent=5 // pred_check
        _
      $region38: #{head_attention.1} parent=5 // pred_check_branch
        %196 = sbr.rel (%p193) target = $region40
      $region39: #{head_attention.1} parent=5 // pred_region
        %s197 = ssub.s32 %s14, 1
        %s198 = smul.u32 2, %s19
        %p199 = scmp.lt.s32.totalorder %s198, 3
        %s200 = scalar_select %p199, %s198, 3
        %s201 = smul.addr %s200, 2
        %s202 = smul.addr %s201, 4
        %s203 = scalar_lea.vmem %s0, %s202
        %p204 = pneg %p40
        %p205 = pneg %p37
        %p206 = pneg %p61
        %p207 = pneg %p58
        %p208 = pneg %p82
        %p209 = pneg %p79
        %p210 = pneg %p103
        %p211 = pneg %p100
        %p212 = pneg %p124
        %p213 = pneg %p121
        %p214 = pneg %p150
        %p215 = pneg %p147
        %s216 = sand.u32 %s137, 1
        %s217 = scalar_lea.sflag [#allocation3], %s216
        %s218 = sand.u32 %s137, 1
        %s219 = smul.addr %s218, 16
        %s220 = scalar_lea.vmem [#allocation2], %s219
        %s221 = smul.u32 2, %s19
        %p222 = scmp.lt.s32.totalorder %s221, 3
        %s223 = scalar_select %p222, %s221, 3
        %s224 = smul.addr %s223, 2
        %s225 = smul.addr %s224, 4
        %s226 = scalar_lea.vmem %s0, %s225
        %s227 = smul.u32 2, %s19
        %s228 = smul.u32 2, %s19
        %v230 = vld [vmem:[%s226] sm:$0xff]
        %v231 = vld [vmem:[%s226 + $0x8] sm:$0xff]
        %v232 = vld [vmem:[%s1] sm:$0xff]
        %v233 = vld [vmem:[%s1 + $0x8] sm:$0xf]
        %v234 = vld [vmem:[%s1 + $0xc] sm:$0xff]
        %v235 = vld [vmem:[%s1 + $0x14] sm:$0xf]
        %v236 = vld [vmem:[%s1 + $0x18] sm:$0xff]
        %v237 = vld [vmem:[%s1 + $0x20] sm:$0xf]
        %v238 = vld [vmem:[%s1 + $0x24] sm:$0xff]
        %v239 = vld [vmem:[%s1 + $0x2c] sm:$0xf]
        %v240 = vld [vmem:[%s1 + $0x30] sm:$0xff]
        %v241 = vld [vmem:[%s1 + $0x38] sm:$0xf]
        %v242 = vld [vmem:[%s1 + $0x3c] sm:$0xff]
        %v243 = vld [vmem:[%s1 + $0x44] sm:$0xf]
        %v244 = vld [vmem:[%s1 + $0x48] sm:$0xff]
        %v245 = vld [vmem:[%s1 + $0x50] sm:$0xf]
        %v246 = vld [vmem:[%s1 + $0x54] sm:$0xff]
        %v247 = vld [vmem:[%s1 + $0x5c] sm:$0xf]
        %v248 = vld [vmem:[%s1 + $0x60] sm:$0xff]
        %v249 = vld [vmem:[%s1 + $0x68] sm:$0xf]
        %v250 = vld [vmem:[%s1 + $0x6c] sm:$0xff]
        %v251 = vld [vmem:[%s1 + $0x74] sm:$0xf]
        %v252 = vld [vmem:[%s1 + $0x78] sm:$0xff]
        %v253 = vld [vmem:[%s1 + $0x80] sm:$0xf]
        %v254 = vld [vmem:[%s1 + $0x84] sm:$0xff]
        %v255 = vld [vmem:[%s1 + $0x8c] sm:$0xf]
        %v256 = vld [vmem:[%s1 + $0x90] sm:$0xff]
        %v257 = vld [vmem:[%s1 + $0x98] sm:$0xf]
        %v258 = vld [vmem:[%s1 + $0x9c] sm:$0xff]
        %v259 = vld [vmem:[%s1 + $0xa4] sm:$0xf]
        %v260 = vld [vmem:[%s1 + $0xa8] sm:$0xff]
        %v261 = vld [vmem:[%s1 + $0xb0] sm:$0xf]
        %v262 = vld [vmem:[%s1 + $0xb4] sm:$0xff]
        %v263 = vld [vmem:[%s1 + $0xbc] sm:$0xf]
        %v264 = vld [vmem:[%s1 + $0xc0] sm:$0xff]
        %v265 = vld [vmem:[%s1 + $0xc8] sm:$0xf]
        %v266 = vld [vmem:[%s1 + $0xcc] sm:$0xff]
        %v267 = vld [vmem:[%s1 + $0xd4] sm:$0xf]
        %v268 = vld [vmem:[%s1 + $0xd8] sm:$0xff]
        %v269 = vld [vmem:[%s1 + $0xe0] sm:$0xf]
        %v270 = vld [vmem:[%s1 + $0xe4] sm:$0xff]
        %v271 = vld [vmem:[%s1 + $0xec] sm:$0xf]
        %v272 = vld [vmem:[%s1 + $0xf0] sm:$0xff]
        %v273 = vld [vmem:[%s1 + $0xf8] sm:$0xf]
        %v274 = vld [vmem:[%s1 + $0xfc] sm:$0xff]
        %v275 = vld [vmem:[%s1 + $0x104] sm:$0xf]
        %v276 = vld [vmem:[%s1 + $0x108] sm:$0xff]
        %v277 = vld [vmem:[%s1 + $0x110] sm:$0xf]
        %v278 = vld [vmem:[%s1 + $0x114] sm:$0xff]
        %v279 = vld [vmem:[%s1 + $0x11c] sm:$0xf]
        %v280 = vld [vmem:[%s1 + $0x120] sm:$0xff]
        %v281 = vld [vmem:[%s1 + $0x128] sm:$0xf]
        %v282 = vld [vmem:[%s1 + $0x12c] sm:$0xff]
        %v283 = vld [vmem:[%s1 + $0x134] sm:$0xf]
        %v284 = vld [vmem:[%s1 + $0x138] sm:$0xff]
        %v285 = vld [vmem:[%s1 + $0x140] sm:$0xf]
        %v286 = vld [vmem:[%s1 + $0x144] sm:$0xff]
        %v287 = vld [vmem:[%s1 + $0x14c] sm:$0xf]
        %v288 = vld [vmem:[%s1 + $0x150] sm:$0xff]
        %v289 = vld [vmem:[%s1 + $0x158] sm:$0xf]
        %v290 = vld [vmem:[%s1 + $0x15c] sm:$0xff]
        %v291 = vld [vmem:[%s1 + $0x164] sm:$0xf]
        %v292 = vld [vmem:[%s1 + $0x168] sm:$0xff]
        %v293 = vld [vmem:[%s1 + $0x170] sm:$0xf]
        %v294 = vld [vmem:[%s1 + $0x174] sm:$0xff]
        %v295 = vld [vmem:[%s1 + $0x17c] sm:$0xf]
        %v298 = vunpack.c.l.b16 %v230
        %v299 = vunpack.c.h.b16 %v230
        %v300 = vunpack.c.l.b16 %v231
        %v301 = vunpack.c.h.b16 %v231
        %v302 = vpack.c.b16 %v300, %v298
        %v303 = vpack.c.b16 %v301, %v299
        %v370 = vunpack.c.l.b16 %v232
        %v371 = vunpack.c.h.b16 %v232
        %v372 = vunpack.c.l.b16 %v233
        %v373 = vunpack.c.l.b16 %v234
        %v374 = vunpack.c.h.b16 %v234
        %v375 = vunpack.c.l.b16 %v235
        %v376 = vunpack.c.l.b16 %v236
        %v377 = vunpack.c.h.b16 %v236
        %v378 = vunpack.c.l.b16 %v237
        %v379 = vunpack.c.l.b16 %v238
        %v380 = vunpack.c.h.b16 %v238
        %v381 = vunpack.c.l.b16 %v239
        %v382 = vunpack.c.l.b16 %v240
        %v383 = vunpack.c.h.b16 %v240
        %v384 = vunpack.c.l.b16 %v241
        %v385 = vunpack.c.l.b16 %v242
        %v386 = vunpack.c.h.b16 %v242
        %v387 = vunpack.c.l.b16 %v243
        %v388 = vunpack.c.l.b16 %v244
        %v389 = vunpack.c.h.b16 %v244
        %v390 = vunpack.c.l.b16 %v245
        %v391 = vunpack.c.l.b16 %v246
        %v392 = vunpack.c.h.b16 %v246
        %v393 = vunpack.c.l.b16 %v247
        %v394 = vunpack.c.l.b16 %v248
        %v395 = vunpack.c.h.b16 %v248
        %v396 = vunpack.c.l.b16 %v249
        %v397 = vunpack.c.l.b16 %v250
        %v398 = vunpack.c.h.b16 %v250
        %v399 = vunpack.c.l.b16 %v251
        %v400 = vunpack.c.l.b16 %v252
        %v401 = vunpack.c.h.b16 %v252
        %v402 = vunpack.c.l.b16 %v253
        %v403 = vunpack.c.l.b16 %v254
        %v404 = vunpack.c.h.b16 %v254
        %v405 = vunpack.c.l.b16 %v255
        %v406 = vunpack.c.l.b16 %v256
        %v407 = vunpack.c.h.b16 %v256
        %v408 = vunpack.c.l.b16 %v257
        %v409 = vunpack.c.l.b16 %v258
        %v410 = vunpack.c.h.b16 %v258
        %v411 = vunpack.c.l.b16 %v259
        %v412 = vunpack.c.l.b16 %v260
        %v413 = vunpack.c.h.b16 %v260
        %v414 = vunpack.c.l.b16 %v261
        %v415 = vunpack.c.l.b16 %v262
        %v416 = vunpack.c.h.b16 %v262
        %v417 = vunpack.c.l.b16 %v263
        %v418 = vunpack.c.l.b16 %v264
        %v419 = vunpack.c.h.b16 %v264
        %v420 = vunpack.c.l.b16 %v265
        %v421 = vunpack.c.l.b16 %v266
        %v422 = vunpack.c.h.b16 %v266
        %v423 = vunpack.c.l.b16 %v267
        %v424 = vunpack.c.l.b16 %v268
        %v425 = vunpack.c.h.b16 %v268
        %v426 = vunpack.c.l.b16 %v269
        %v427 = vunpack.c.l.b16 %v270
        %v428 = vunpack.c.h.b16 %v270
        %v429 = vunpack.c.l.b16 %v271
        %v430 = vunpack.c.l.b16 %v272
        %v431 = vunpack.c.h.b16 %v272
        %v432 = vunpack.c.l.b16 %v273
        %v433 = vunpack.c.l.b16 %v274
        %v434 = vunpack.c.h.b16 %v274
        %v435 = vunpack.c.l.b16 %v275
        %v436 = vunpack.c.l.b16 %v276
        %v437 = vunpack.c.h.b16 %v276
        %v438 = vunpack.c.l.b16 %v277
        %v439 = vunpack.c.l.b16 %v278
        %v440 = vunpack.c.h.b16 %v278
        %v441 = vunpack.c.l.b16 %v279
        %v442 = vunpack.c.l.b16 %v280
        %v443 = vunpack.c.h.b16 %v280
        %v444 = vunpack.c.l.b16 %v281
        %v445 = vunpack.c.l.b16 %v282
        %v446 = vunpack.c.h.b16 %v282
        %v447 = vunpack.c.l.b16 %v283
        %v448 = vunpack.c.l.b16 %v284
        %v449 = vunpack.c.h.b16 %v284
        %v450 = vunpack.c.l.b16 %v285
        %v451 = vunpack.c.l.b16 %v286
        %v452 = vunpack.c.h.b16 %v286
        %v453 = vunpack.c.l.b16 %v287
        %v454 = vunpack.c.l.b16 %v288
        %v455 = vunpack.c.h.b16 %v288
        %v456 = vunpack.c.l.b16 %v289
        %v457 = vunpack.c.l.b16 %v290
        %v458 = vunpack.c.h.b16 %v290
        %v459 = vunpack.c.l.b16 %v291
        %v460 = vunpack.c.l.b16 %v292
        %v461 = vunpack.c.h.b16 %v292
        %v462 = vunpack.c.l.b16 %v293
        %v463 = vunpack.c.l.b16 %v294
        %v464 = vunpack.c.h.b16 %v294
        %v465 = vunpack.c.l.b16 %v295
        %v466 = vpack.c.b16 %v373, %v370
        %v467 = vpack.c.b16 %v374, %v371
        %v468 = vpack.c.b16 %v375, %v372
        %v469 = vpack.c.b16 %v379, %v376
        %v470 = vpack.c.b16 %v380, %v377
        %v471 = vpack.c.b16 %v381, %v378
        %v472 = vpack.c.b16 %v385, %v382
        %v473 = vpack.c.b16 %v386, %v383
        %v474 = vpack.c.b16 %v387, %v384
        %v475 = vpack.c.b16 %v391, %v388
        %v476 = vpack.c.b16 %v392, %v389
        %v477 = vpack.c.b16 %v393, %v390
        %v478 = vpack.c.b16 %v397, %v394
        %v479 = vpack.c.b16 %v398, %v395
        %v480 = vpack.c.b16 %v399, %v396
        %v481 = vpack.c.b16 %v403, %v400
        %v482 = vpack.c.b16 %v404, %v401
        %v483 = vpack.c.b16 %v405, %v402
        %v484 = vpack.c.b16 %v409, %v406
        %v485 = vpack.c.b16 %v410, %v407
        %v486 = vpack.c.b16 %v411, %v408
        %v487 = vpack.c.b16 %v415, %v412
        %v488 = vpack.c.b16 %v416, %v413
        %v489 = vpack.c.b16 %v417, %v414
        %v490 = vpack.c.b16 %v421, %v418
        %v491 = vpack.c.b16 %v422, %v419
        %v492 = vpack.c.b16 %v423, %v420
        %v493 = vpack.c.b16 %v427, %v424
        %v494 = vpack.c.b16 %v428, %v425
        %v495 = vpack.c.b16 %v429, %v426
        %v496 = vpack.c.b16 %v433, %v430
        %v497 = vpack.c.b16 %v434, %v431
        %v498 = vpack.c.b16 %v435, %v432
        %v499 = vpack.c.b16 %v439, %v436
        %v500 = vpack.c.b16 %v440, %v437
        %v501 = vpack.c.b16 %v441, %v438
        %v502 = vpack.c.b16 %v445, %v442
        %v503 = vpack.c.b16 %v446, %v443
        %v504 = vpack.c.b16 %v447, %v444
        %v505 = vpack.c.b16 %v451, %v448
        %v506 = vpack.c.b16 %v452, %v449
        %v507 = vpack.c.b16 %v453, %v450
        %v508 = vpack.c.b16 %v457, %v454
        %v509 = vpack.c.b16 %v458, %v455
        %v510 = vpack.c.b16 %v459, %v456
        %v511 = vpack.c.b16 %v463, %v460
        %v512 = vpack.c.b16 %v464, %v461
        %v513 = vpack.c.b16 %v465, %v462
        %562 = vmatprep.subr.bf16.mxu0 %v488
        %563 = vmatpush1.bf16.msra.mxu0 %v487
        %564 = vmatprep.subr.bf16.mxu0 %v485
        %565 = vmatpush1.bf16.msra.mxu0 %v484
        %566 = vmatprep.subr.bf16.mxu0 %v482
        %567 = vmatpush1.bf16.msra.mxu0 %v481
        %568 = vmatprep.subr.bf16.mxu0 %v479
        %569 = vmatpush1.bf16.msra.mxu0 %v478
        %570 = vmatprep.subr.bf16.mxu0 %v476
        %571 = vmatpush1.bf16.msra.mxu0 %v475
        %572 = vmatprep.subr.bf16.mxu0 %v473
        %573 = vmatpush1.bf16.msra.mxu0 %v472
        %574 = vmatprep.subr.bf16.mxu0 %v470
        %575 = vmatpush1.bf16.msra.mxu0 %v469
        %576 = vmatprep.subr.bf16.mxu0 %v467
        %577 = vmatpush1.bf16.msra.mxu0 %v466
        %578 = vmatprep.subr.bf16.mxu0 %v512
        %579 = vmatpush2.bf16.msra.mxu0 %v511
        %580 = vmatprep.subr.bf16.mxu0 %v509
        %581 = vmatpush2.bf16.msra.mxu0 %v508
        %582 = vmatprep.subr.bf16.mxu0 %v506
        %583 = vmatpush2.bf16.msra.mxu0 %v505
        %584 = vmatprep.subr.bf16.mxu0 %v503
        %585 = vmatpush2.bf16.msra.mxu0 %v502
        %586 = vmatprep.subr.bf16.mxu0 %v500
        %587 = vmatpush2.bf16.msra.mxu0 %v499
        %588 = vmatprep.subr.bf16.mxu0 %v497
        %589 = vmatpush2.bf16.msra.mxu0 %v496
        %590 = vmatprep.subr.bf16.mxu0 %v494
        %591 = vmatpush2.bf16.msra.mxu0 %v493
        %592 = vmatprep.subr.bf16.mxu0 %v491
        %593 = vmatpush2.bf16.msra.mxu0 %v490
        %594 = vmatprep.mubr.bf16.mxu0 %v303
        %595 = vmatmul.mubr.bf16.gmra.mxu0 %v302
        %v596 = vpop.f32.mrf.mxu0
        %v597 = vadd.f32 0.0, %v596
        %v598 = vpop.f32.mrf.mxu0
        %v599 = vadd.f32 0.0, %v598
        %v600 = vpop.f32.mrf.mxu0
        %v601 = vadd.f32 0.0, %v600
        %v602 = vpop.f32.mrf.mxu0
        %v603 = vadd.f32 0.0, %v602
        %604 = vdwg.mxu0
        %605 = vmatprep.subr.bf16.mxu0 0
        %606 = vmatpush1.bf16.msra.mxu0 %v489
        %607 = vmatprep.subr.bf16.mxu0 0
        %608 = vmatpush1.bf16.msra.mxu0 %v486
        %609 = vmatprep.subr.bf16.mxu0 0
        %610 = vmatpush1.bf16.msra.mxu0 %v483
        %611 = vmatprep.subr.bf16.mxu0 0
        %612 = vmatpush1.bf16.msra.mxu0 %v480
        %613 = vmatprep.subr.bf16.mxu0 0
        %614 = vmatpush1.bf16.msra.mxu0 %v477
        %615 = vmatprep.subr.bf16.mxu0 0
        %616 = vmatpush1.bf16.msra.mxu0 %v474
        %617 = vmatprep.subr.bf16.mxu0 0
        %618 = vmatpush1.bf16.msra.mxu0 %v471
        %619 = vmatprep.subr.bf16.mxu0 0
        %620 = vmatpush1.bf16.msra.mxu0 %v468
        %621 = vmatprep.subr.bf16.mxu0 0
        %622 = vmatpush2.bf16.msra.mxu0 %v513
        %623 = vmatprep.subr.bf16.mxu0 0
        %624 = vmatpush2.bf16.msra.mxu0 %v510
        %625 = vmatprep.subr.bf16.mxu0 0
        %626 = vmatpush2.bf16.msra.mxu0 %v507
        %627 = vmatprep.subr.bf16.mxu0 0
        %628 = vmatpush2.bf16.msra.mxu0 %v504
        %629 = vmatprep.subr.bf16.mxu0 0
        %630 = vmatpush2.bf16.msra.mxu0 %v501
        %631 = vmatprep.subr.bf16.mxu0 0
        %632 = vmatpush2.bf16.msra.mxu0 %v498
        %633 = vmatprep.subr.bf16.mxu0 0
        %634 = vmatpush2.bf16.msra.mxu0 %v495
        %635 = vmatprep.subr.bf16.mxu0 0
        %636 = vmatpush2.bf16.msra.mxu0 %v492
        %637 = vmatprep.mubr.bf16.mxu0 %v303
        %638 = vmatmul.mubr.bf16.gmra.mxu0 %v302
        %v639 = vpop.f32.mrf.mxu0
        %v640 = vadd.f32 0.0, %v639
        %v641 = vpop.f32.mrf.mxu0
        %v642 = vpop.f32.mrf.mxu0
        %v643 = vadd.f32 0.0, %v642
        %v644 = vpop.f32.mrf.mxu0
        %645 = vdwg.mxu0
        %v646 = vld [vmem:[%s2] sm:$0xff]
        %v647 = vld [vmem:[%s2 + $0x8] sm:$0xff]
        %v648 = vld [vmem:[%s3] sm:$0xff]
        %v649 = vld [vmem:[%s3 + $0x8] sm:$0xff]
        %v650 = vmul.f32 %v597, %v646
        %v651 = vmul.f32 %v601, %v647
        %654 = vrot.lane.b32.xlu0 %v648, 64
        %v655 = vpop.permute.xlu0 %654
        %656 = vrot.lane.b32.xlu0 %v649, 64
        %v657 = vpop.permute.xlu0 %656
        %v660 = vmul.f32 %v597, %v655
        %v661 = vmul.f32 %v601, %v657
        %664 = vrot.lane.b32.xlu0 %v660, 64
        %v665 = vpop.permute.xlu0 %664
        %666 = vrot.lane.b32.xlu0 %v661, 64
        %v667 = vpop.permute.xlu0 %666
        %v670 = vadd.f32 %v650, %v665
        %v671 = vadd.f32 %v651, %v667
        %v672 = vmul.f32 %v599, %v646
        %v673 = vmul.f32 %v603, %v647
        %v674 = vmul.f32 %v599, %v655
        %v675 = vmul.f32 %v603, %v657
        %678 = vrot.lane.b32.xlu0 %v674, 64
        %v679 = vpop.permute.xlu0 %678
        %680 = vrot.lane.b32.xlu0 %v675, 64
        %v681 = vpop.permute.xlu0 %680
        %v684 = vadd.f32 %v672, %v679
        %v685 = vadd.f32 %v673, %v681
        %v686 = vpack.c.bf16 %v671, %v670
        %v687 = vpack.c.bf16 %v685, %v684
        %v688 = vld [vmem:[%s4] sm:$0xff]
        %v689 = vld [vmem:[%s4 + $0x8] sm:$0xff]
        %vm690 = vcmask 523264
        %v692 = vsel %vm690, %v686, 0
        %v695 = vsel %vm690, %v687, 0
        %697 = vmatprep.subr.bf16.mxu0 0
        %698 = vmatpush1.bf16.xpose.msra.mxu0 0
        %699 = vmatprep.subr.bf16.mxu0 0
        %700 = vmatpush1.bf16.xpose.msra.mxu0 0
        %701 = vmatprep.subr.bf16.mxu0 0
        %702 = vmatpush1.bf16.xpose.msra.mxu0 0
        %703 = vmatprep.subr.bf16.mxu0 0
        %704 = vmatpush1.bf16.xpose.msra.mxu0 0
        %705 = vmatprep.subr.bf16.mxu0 0
        %706 = vmatpush1.bf16.xpose.msra.mxu0 0
        %707 = vmatprep.subr.bf16.mxu0 0
        %708 = vmatpush1.bf16.xpose.msra.mxu0 0
        %709 = vmatprep.subr.bf16.mxu0 0
        %710 = vmatpush1.bf16.xpose.msra.mxu0 0
        %711 = vmatprep.subr.bf16.mxu0 0
        %712 = vmatpush1.bf16.xpose.msra.mxu0 %v695
        %713 = vmatprep.subr.bf16.mxu0 0
        %714 = vmatpush2.bf16.xpose.msra.mxu0 0
        %715 = vmatprep.subr.bf16.mxu0 0
        %716 = vmatpush2.bf16.xpose.msra.mxu0 0
        %717 = vmatprep.subr.bf16.mxu0 0
        %718 = vmatpush2.bf16.xpose.msra.mxu0 0
        %719 = vmatprep.subr.bf16.mxu0 0
        %720 = vmatpush2.bf16.xpose.msra.mxu0 0
        %721 = vmatprep.subr.bf16.mxu0 0
        %722 = vmatpush2.bf16.xpose.msra.mxu0 0
        %723 = vmatprep.subr.bf16.mxu0 0
        %724 = vmatpush2.bf16.xpose.msra.mxu0 0
        %725 = vmatprep.subr.bf16.mxu0 0
        %726 = vmatpush2.bf16.xpose.msra.mxu0 0
        %727 = vmatprep.subr.bf16.mxu0 0
        %728 = vmatpush2.bf16.xpose.msra.mxu0 0
        %729 = vmatprep.mubr.bf16.mxu0 0
        %730 = vmatmul.mubr.bf16.gmra.mxu0 %v692
        %v731 = vpop.f32.mrf.mxu0
        %v732 = vadd.f32 %v688, %v731
        %v733 = vpop.f32.mrf.mxu0
        %v734 = vpop.f32.mrf.mxu0
        %v735 = vadd.f32 %v689, %v734
        %v736 = vpop.f32.mrf.mxu0
        %737 = vdwg.mxu0
        %vm738 = vcmask 130048
        %v739 = vsel %vm738, %v732, -inf
        %740 = vmax.xlane.f32.xlu0 %v739
        %v741 = vpop.xlane.xlu0 %740
        %v742 = vsel %vm738, %v735, -inf
        %743 = vmax.xlane.f32.xlu0 %v742
        %v744 = vpop.xlane.xlu0 %743
        %v745 = vsub.f32 %v732, %v741
        %v746 = vsub.f32 %v735, %v744
        %v747 = vmul.f32 %v745, 1.442695
        %v748 = vpow.pop %v747
        %v749 = vmul.f32 %v746, 1.442695
        %v750 = vpow.pop %v749
        %v751 = vsel %vm738, %v748, 0.0
        %752 = vadd.xlane.f32.xlu0 %v751
        %v753 = vpop.xlane.xlu0 %752
        %v754 = vsel %vm738, %v750, 0.0
        %755 = vadd.xlane.f32.xlu0 %v754
        %v756 = vpop.xlane.xlu0 %755
        %v757 = vrcp.pop %v753
        %v758 = vrcp.pop %v756
        %v759 = vmul.f32 %v748, %v757
        %v760 = vmul.f32 %v750, %v758
        %v761 = vpack.c.bf16 %v760, %v759
        %v762 = vpack.c.bf16 %v643, %v640
        %v764 = vsel %vm738, %v761, 0
        %766 = vmatprep.subr.bf16.mxu0 0
        %767 = vmatpush1.bf16.msra.mxu0 0
        %768 = vmatprep.subr.bf16.mxu0 0
        %769 = vmatpush1.bf16.msra.mxu0 0
        %770 = vmatprep.subr.bf16.mxu0 0
        %771 = vmatpush1.bf16.msra.mxu0 0
        %772 = vmatprep.subr.bf16.mxu0 0
        %773 = vmatpush1.bf16.msra.mxu0 0
        %774 = vmatprep.subr.bf16.mxu0 0
        %775 = vmatpush1.bf16.msra.mxu0 0
        %776 = vmatprep.subr.bf16.mxu0 0
        %777 = vmatpush1.bf16.msra.mxu0 0
        %778 = vmatprep.subr.bf16.mxu0 0
        %779 = vmatpush1.bf16.msra.mxu0 0
        %780 = vmatprep.subr.bf16.mxu0 0
        %781 = vmatpush1.bf16.msra.mxu0 %v762
        %782 = vmatprep.subr.bf16.mxu0 0
        %783 = vmatpush2.bf16.msra.mxu0 0
        %784 = vmatprep.subr.bf16.mxu0 0
        %785 = vmatpush2.bf16.msra.mxu0 0
        %786 = vmatprep.subr.bf16.mxu0 0
        %787 = vmatpush2.bf16.msra.mxu0 0
        %788 = vmatprep.subr.bf16.mxu0 0
        %789 = vmatpush2.bf16.msra.mxu0 0
        %790 = vmatprep.subr.bf16.mxu0 0
        %791 = vmatpush2.bf16.msra.mxu0 0
        %792 = vmatprep.subr.bf16.mxu0 0
        %793 = vmatpush2.bf16.msra.mxu0 0
        %794 = vmatprep.subr.bf16.mxu0 0
        %795 = vmatpush2.bf16.msra.mxu0 0
        %796 = vmatprep.subr.bf16.mxu0 0
        %797 = vmatpush2.bf16.msra.mxu0 0
        %798 = vmatprep.mubr.bf16.mxu0 0
        %799 = vmatmul.mubr.bf16.gmra.mxu0 %v764
        %v800 = vpop.f32.mrf.mxu0
        %v801 = vadd.f32 0.0, %v800
        %v802 = vpop.f32.mrf.mxu0
        %v803 = vpop.f32.mrf.mxu0
        %v804 = vadd.f32 0.0, %v803
        %v805 = vpop.f32.mrf.mxu0
        %806 = vdwg.mxu0
        %807 = vst.msk [vmem:[%s220] sm:$0xff] %vm690, %v801
        %808 = vst.msk [vmem:[%s220 + $0x8] sm:$0xff] %vm690, %v804
        %s809 = sand.u32 %s137, 1
        %s810 = scalar_lea.sflag [#allocation3], %s809
        %s811 = sand.u32 %s137, 1
        %s812 = smul.addr %s811, 16
        %s813 = scalar_lea.vmem [#allocation2], %s812
        // Predicated region
        $region41: #{head_attention.1} parent=39 // pred_check
          %p814 = pneg %p147
        $region42: #{head_attention.1} parent=39 // pred_check_branch
          %816 = sbr.rel (%p814) target = $region44
        $region43: #{head_attention.1} parent=39 // pred_region
          %s817 = smul.u32 2, %s19
          %s819 = ssub.s32 256, 256
          %820 = vsyncadd %s810, %s819
          %s821 = smul.addr %s817, 128
          %s822 = scalar_lea.hbm %s5, %s821
          %s823 = sshll.u32 %s813, 4
          %s824 = int_to_ptr.vmem [resolvable:$true] %s823
          %829 = dma.vmem_to_hbm [thread:$0]  %s824, 256, %s822, %s810, 128, 128, 8
        $region44: #{head_attention.1} parent=39 // pred_fallthru
          _
      $region40: #{head_attention.1} parent=5 // pred_fallthru
        _
      %p830 = scmp.le.s32.totalorder 2, %s14
      // Predicated region
      $region45: #{head_attention.1} parent=5 // pred_check
        %p831 = pneg %p830
      $region46: #{head_attention.1} parent=5 // pred_check_branch
        %833 = sbr.rel (%p831) target = $region48
      $region47: #{head_attention.1} parent=5 // pred_region
        %s834 = ssub.s32 %s14, 2
        // Predicated region
        $region49: #{head_attention.1} parent=47 // pred_check
          %p835 = pneg %p153
        $region50: #{head_attention.1} parent=47 // pred_check_branch
          %837 = sbr.rel (%p835) target = $region52
        $region51: #{head_attention.1} parent=47 // pred_region
          %s838 = sand.u32 %s138, 1
          %s839 = scalar_lea.sflag [#allocation3], %s838
          %s840 = sand.u32 %s138, 1
          %s841 = smul.addr %s840, 16
          %s842 = scalar_lea.vmem [#allocation2], %s841
          %843 = dma.done %s839, 256
        $region52: #{head_attention.1} parent=47 // pred_fallthru
          _
      $region48: #{head_attention.1} parent=5 // pred_fallthru
        _
    $region6: #{head_attention.1} parent=1 // loop_footer
      %s18 = sadd.s32 1, %s14
    $region7: #{head_attention.1} parent=1 // loop_footer_branch
      %13 = sbr.rel target = $region3
    $region8: #{head_attention.1} parent=1 // loop_exit
      _
    %844 = vsyncpa [#allocation3], 1
    %s845 = scalar_lea.sflag [#allocation3], 1
    %846 = vsyncpa %s845, 1

</llo_original>
